<compile_context>
chip_gen: v6e
topology: v6e:2x2x1
jax: 0.10.0
libtpu: 0.0.40
codegen_flags: <defaults>
</compile_context>

<pallas_src>
import functools

import jax
import jax.numpy as jnp
from jax.experimental import pallas as pl
from jax.experimental.pallas import tpu as pltpu

LANE = 128
SUBLANE = 8


def _round_up(x, m):
    return ((x + m - 1) // m) * m


def critic_kernel(x_ref, w1_ref, w2_ref, pack_ref, out_ref):
    # pack_ref rows: 0 = b1, 1 = b2, 2 = w3 (as a row), 3 = b3 (broadcast).
    b1 = pack_ref[0:1, :]            # [1, Hp] f32
    b2 = pack_ref[1:2, :]            # [1, Hp] f32
    w3 = pack_ref[2:3, :]            # [1, Hp] f32
    b3 = pack_ref[3:4, 0:1]          # [1, 1]  f32

    # fc1: relu( [state, action] @ W1 + b1 )  — bf16 MXU matmul, f32 accumulate.
    h1 = jnp.dot(x_ref[...], w1_ref[...], preferred_element_type=jnp.float32)
    h1 = jnp.maximum(h1 + b1, 0.0)

    # fc2: relu( h1 @ W2 + b2 )  — cast activation back to the MXU dtype.
    h2 = jnp.dot(h1.astype(w2_ref.dtype), w2_ref[...],
                 preferred_element_type=jnp.float32)
    h2 = jnp.maximum(h2 + b2, 0.0)

    # fc3: N=1 "matmul" as VPU multiply + XLU lane reduce (no MXU push/drain
    # for a single useful lane).
    q = jnp.sum(h2 * w3, axis=-1, keepdims=True) + b3
    # NOTE: out is a [TB, 1] column (lane-sparse store).  A lane-dense
    # (grid, TB)-shaped output would avoid masked vst.msk stores; output bytes
    # here are tiny, so only do that if profiling shows a store-bound epilogue.
    out_ref[...] = q.astype(out_ref.dtype)


def prepare_params(params, *, lane_align=LANE, mxu_dtype=jnp.bfloat16):
    """One-time repack of the nn.Linear-style params into the kernel layout.

    * Hidden dim is zero-padded to a multiple of `lane_align` lanes (exact:
      padded b1/b2 entries are 0, ReLU(0)=0, padded w3 lanes are 0).
      Use lane_align=256 on v6e/v7x when hidden_dim >= 256 (2x256 MXU); keep
      128 on v5e (4x128 MXU).
    * fc1 input dim is padded only to a multiple of 8 sublanes — the x block's
      last dim equals the full array dim, so no 128-lane padding is needed.
    * Weights are stored in `mxu_dtype` (bf16 by default) for the bf16 MXU
      path; the tiny bias/w3 pack stays f32 for exact bias adds.
    Call once outside the hot loop.
    """
    w1, b1 = params["w1"], params["b1"]        # [S+A, H], [H]
    w2, b2 = params["w2"], params["b2"]        # [H, H],   [H]
    w3, b3 = params["w3"], params["b3"]        # [H, 1],   [1]
    in_dim, hidden = w1.shape

    kp = _round_up(in_dim, SUBLANE)
    hp = _round_up(hidden, lane_align)

    w1p = jnp.zeros((kp, hp), mxu_dtype).at[:in_dim, :hidden].set(
        w1.astype(mxu_dtype))
    w2p = jnp.zeros((hp, hp), mxu_dtype).at[:hidden, :hidden].set(
        w2.astype(mxu_dtype))

    pack = jnp.zeros((4, hp), jnp.float32)
    pack = pack.at[0, :hidden].set(b1.astype(jnp.float32))
    pack = pack.at[1, :hidden].set(b2.astype(jnp.float32))
    pack = pack.at[2, :hidden].set(w3[:, 0].astype(jnp.float32))
    pack = pack.at[3, :].set(b3[0].astype(jnp.float32))   # only lane 0 is read

    return {"w1": w1p, "w2": w2p, "pack": pack}


def _batch_tile(B, tb):
    """Pick the batch tile: multiple of 8, big enough to amortize per-step
    overhead, but small enough that large B gives >= 2 grid steps (so
    ("parallel",) can shard the grid across v7x's two TensorCores)."""
    tb = max(SUBLANE, (tb // SUBLANE) * SUBLANE)   # BlockSpec sublane rule
    tb = min(tb, _round_up(-(-B // 2), LANE))      # >= 2 steps when B is large
    return min(B, tb)


@functools.partial(jax.jit, static_argnames=("tb", "single_buffer_weights"))
def critic_forward(state, action, prep, *, tb=1024, single_buffer_weights=True):
    """CriticNet forward: q = fc3(relu(fc2(relu(fc1([state, action]))))).

    state: [B, S], action: [B, A], prep: output of prepare_params.
    Returns q: [B, 1] f32.
    """
    B, S = state.shape
    _, A = action.shape
    kp, hp = prep["w1"].shape
    mxu_dtype = prep["w1"].dtype
    itemsize = mxu_dtype.itemsize

    # Cast to the MXU dtype and concatenate (+ sublane pad) — a single fused
    # XLA op writing only B*Kp*2 bytes (no 128-lane padded slab in HBM).
    parts = [state.astype(mxu_dtype), action.astype(mxu_dtype)]
    pad = kp - (S + A)
    if pad:
        parts.append(jnp.zeros((B, pad), mxu_dtype))
    x = jnp.concatenate(parts, axis=-1)            # [B, Kp]

    TB = _batch_tile(B, tb)
    grid = (pl.cdiv(B, TB),)

    # Grid-invariant operands: index_map is constant, so re-DMA never happens;
    # single-buffer them to halve their resident VMEM footprint.
    resident = dict(pipeline_mode=pl.Buffered(1)) if single_buffer_weights else {}

    flops = 2 * B * hp * (kp + hp) + 2 * B * hp
    bytes_accessed = (B * kp * itemsize            # x
                      + kp * hp * itemsize         # w1
                      + hp * hp * itemsize         # w2
                      + 4 * hp * 4                 # bias/w3 pack
                      + B * 4)                     # q
    cost = pl.CostEstimate(flops=int(flops), transcendentals=0,
                           bytes_accessed=int(bytes_accessed))

    # VMEM plan (matters on v5e's 16 MiB scoped default and v7x's 64 MiB VMEM):
    wbuf = 1 if single_buffer_weights else 2
    vmem_bytes = (2 * TB * kp * itemsize                     # x double-buffer
                  + wbuf * (kp * hp + hp * hp) * itemsize    # resident weights
                  + 2 * SUBLANE * hp * 4                     # bias pack (padded)
                  + 2 * TB * LANE * 4                        # out double-buffer
                  + 4 * TB * hp * 4)                         # h1/h2 f32 temps
    vmem_limit = int(min(max(2 * vmem_bytes, 16 << 20), 64 << 20))

    out = pl.pallas_call(
        critic_kernel,
        out_shape=jax.ShapeDtypeStruct((B, 1), jnp.float32),
        grid=grid,
        in_specs=[
            pl.BlockSpec((TB, kp), lambda i: (i, 0)),             # x (streamed)
            pl.BlockSpec((kp, hp), lambda i: (0, 0), **resident),  # w1 (resident)
            pl.BlockSpec((hp, hp), lambda i: (0, 0), **resident),  # w2 (resident)
            pl.BlockSpec((4, hp), lambda i: (0, 0), **resident),   # b1/b2/w3/b3
        ],
        out_specs=pl.BlockSpec((TB, 1), lambda i: (i, 0)),
        compiler_params=pltpu.CompilerParams(
            dimension_semantics=("parallel",),      # megacore / v7x 2-TC split
            vmem_limit_bytes=vmem_limit,
        ),
        cost_estimate=cost,
    )(x, prep["w1"], prep["w2"], prep["pack"])
    return out


def _run(state, action, prep):
    try:
        return critic_forward(state, action, prep)
    except Exception:
        # TODO(synk): pl.Buffered(1) (single-buffered resident weights) was
        # rejected by this JAX build; fall back to default double-buffering.
        return critic_forward(state, action, prep, single_buffer_weights=False)


def init_params(key, state_dim, action_dim, hidden_dim):
    """Deterministic init mimicking nn.Linear default (uniform +/- 1/sqrt(fan_in))."""
    ks = jax.random.split(key, 6)

    def linear(kw, kb, fan_in, fan_out):
        bound = 1.0 / jnp.sqrt(jnp.asarray(fan_in, jnp.float32))
        w = jax.random.uniform(kw, (fan_in, fan_out), jnp.float32, -bound, bound)
        b = jax.random.uniform(kb, (fan_out,), jnp.float32, -bound, bound)
        return w, b

    w1, b1 = linear(ks[0], ks[1], state_dim + action_dim, hidden_dim)
    w2, b2 = linear(ks[2], ks[3], hidden_dim, hidden_dim)
    w3, b3 = linear(ks[4], ks[5], hidden_dim, 1)
    return {"w1": w1, "b1": b1, "w2": w2, "b2": b2, "w3": w3, "b3": b3}


def critic_ref(state, action, p):
    """Pure-JAX f32 reference (matches the PyTorch module)."""
    x = jnp.concatenate([state, action], axis=-1)
    x = jnp.maximum(x @ p["w1"] + p["b1"], 0.0)
    x = jnp.maximum(x @ p["w2"] + p["b2"], 0.0)
    return x @ p["w3"] + p["b3"]


if __name__ == "__main__":
    B, state_dim, action_dim, hidden_dim = 8, 16, 16, 32

    key = jax.random.PRNGKey(0)
    k_state, k_action, k_params = jax.random.split(key, 3)

    state = jax.random.normal(k_state, (B, state_dim), jnp.float32)
    action = jax.random.normal(k_action, (B, action_dim), jnp.float32)
    params = init_params(k_params, state_dim, action_dim, hidden_dim)

    q_ref = critic_ref(state, action, params)

    # Exact-math check: same kernel with f32 weights must match tightly.
    prep_f32 = prepare_params(params, mxu_dtype=jnp.float32)
    q_f32 = jax.block_until_ready(_run(state, action, prep_f32))
    assert q_f32.shape == (B, 1)
    assert jnp.allclose(q_f32, q_ref, atol=1e-4, rtol=1e-4)

    # Primary bf16-MXU path: relaxed tolerance (bf16 inputs, f32 accumulate).
    prep = prepare_params(params)              # one-time repack / pad / bf16 cast
    q = jax.block_until_ready(_run(state, action, prep))
    assert q.shape == (B, 1)
    assert jnp.allclose(q, q_ref, atol=5e-2, rtol=5e-2)

    print("KERNEL_OK")
</pallas_src>

<mosaic_0001>
module attributes {stable_mosaic.version = 11 : i64} {
  func.func @critic_kernel(%arg0: i32, %arg1: memref<8x32xf32, #tpu.memory_space<vmem>>, %arg2: memref<32x128xf32, #tpu.memory_space<vmem>>, %arg3: memref<128x128xf32, #tpu.memory_space<vmem>>, %arg4: memref<4x128xf32, #tpu.memory_space<vmem>>, %arg5: memref<8x1xf32, #tpu.memory_space<vmem>>) attributes {dimension_semantics = [#tpu.dimension_semantics<parallel>], iteration_bounds = array<i64: 1>, scalar_prefetch = 0 : i64, scratch_operands = 0 : i64, tpu.core_type = #tpu.core_type<tc>, window_params = [{transform_indices = @transform_0, window_bounds = array<i64: 8, 32>}, {pipeline_mode = #tpu.pipeline_mode<synchronous>, transform_indices = @transform_1, window_bounds = array<i64: 32, 128>}, {pipeline_mode = #tpu.pipeline_mode<synchronous>, transform_indices = @transform_2, window_bounds = array<i64: 128, 128>}, {pipeline_mode = #tpu.pipeline_mode<synchronous>, transform_indices = @transform_3, window_bounds = array<i64: 4, 128>}, {transform_indices = @transform_4, window_bounds = array<i64: 8, 1>}]} {
    %c0 = arith.constant 0 : index
    %c0_0 = arith.constant 0 : index
    %0 = vector.load %arg4[%c0, %c0_0] : memref<4x128xf32, #tpu.memory_space<vmem>>, vector<1x128xf32>
    %c1 = arith.constant 1 : index
    %c0_1 = arith.constant 0 : index
    %1 = vector.load %arg4[%c1, %c0_1] : memref<4x128xf32, #tpu.memory_space<vmem>>, vector<1x128xf32>
    %c2 = arith.constant 2 : index
    %c0_2 = arith.constant 0 : index
    %2 = vector.load %arg4[%c2, %c0_2] : memref<4x128xf32, #tpu.memory_space<vmem>>, vector<1x128xf32>
    %c3 = arith.constant 3 : index
    %c0_3 = arith.constant 0 : index
    %3 = vector.load %arg4[%c3, %c0_3] : memref<4x128xf32, #tpu.memory_space<vmem>>, vector<1x1xf32>
    %c0_4 = arith.constant 0 : index
    %c0_5 = arith.constant 0 : index
    %4 = vector.load %arg1[%c0_4, %c0_5] : memref<8x32xf32, #tpu.memory_space<vmem>>, vector<8x32xf32>
    %c0_6 = arith.constant 0 : index
    %c0_7 = arith.constant 0 : index
    %5 = vector.load %arg2[%c0_6, %c0_7] : memref<32x128xf32, #tpu.memory_space<vmem>>, vector<32x128xf32>
    %cst = arith.constant dense<0.000000e+00> : vector<8x128xf32>
    %6 = tpu.matmul %4, %5, %cst {dimension_numbers = #tpu.dot_dimension_numbers<[1], [0], [0], [1], [0, 0, 1, 1], [], []>} : vector<8x32xf32>, vector<32x128xf32>, vector<8x128xf32> -> vector<8x128xf32>
    %7 = vector.broadcast %0 : vector<1x128xf32> to vector<8x128xf32>
    %8 = arith.addf %6, %7 : vector<8x128xf32>
    %cst_8 = arith.constant 0.000000e+00 : f32
    %9 = vector.broadcast %cst_8 : f32 to vector<8x128xf32>
    %10 = arith.maximumf %8, %9 : vector<8x128xf32>
    %c0_9 = arith.constant 0 : index
    %c0_10 = arith.constant 0 : index
    %11 = vector.load %arg3[%c0_9, %c0_10] : memref<128x128xf32, #tpu.memory_space<vmem>>, vector<128x128xf32>
    %cst_11 = arith.constant dense<0.000000e+00> : vector<8x128xf32>
    %12 = tpu.matmul %10, %11, %cst_11 {dimension_numbers = #tpu.dot_dimension_numbers<[1], [0], [0], [1], [0, 0, 1, 1], [], []>} : vector<8x128xf32>, vector<128x128xf32>, vector<8x128xf32> -> vector<8x128xf32>
    %13 = vector.broadcast %1 : vector<1x128xf32> to vector<8x128xf32>
    %14 = arith.addf %12, %13 : vector<8x128xf32>
    %cst_12 = arith.constant 0.000000e+00 : f32
    %15 = vector.broadcast %cst_12 : f32 to vector<8x128xf32>
    %16 = arith.maximumf %14, %15 : vector<8x128xf32>
    %17 = vector.broadcast %2 : vector<1x128xf32> to vector<8x128xf32>
    %18 = arith.mulf %16, %17 : vector<8x128xf32>
    %cst_13 = arith.constant dense<0.000000e+00> : vector<8xf32>
    %19 = vector.multi_reduction <add>, %18, %cst_13 [1] : vector<8x128xf32> to vector<8xf32>
    %20 = vector.shape_cast %19 : vector<8xf32> to vector<8x1xf32>
    %21 = vector.broadcast %3 : vector<1x1xf32> to vector<8x1xf32>
    %22 = arith.addf %20, %21 : vector<8x1xf32>
    %c0_14 = arith.constant 0 : index
    %c0_15 = arith.constant 0 : index
    %23 = vector.load %arg5[%c0_14, %c0_15] : memref<8x1xf32, #tpu.memory_space<vmem>>, vector<8x1xf32>
    tpu.vector_store %arg5[%c0_14, %c0_15], %22 {strides = array<i32>} : memref<8x1xf32, #tpu.memory_space<vmem>>, vector<8x1xf32>,
    return
  }
  func.func @transform_0(%arg0: i32) -> (i32, i32) {
    %c0_i32 = arith.constant 0 : i32
    %c0_i32_0 = arith.constant 0 : i32
    return %arg0, %c0_i32 : i32, i32
  }
  func.func @transform_1(%arg0: i32) -> (i32, i32) {
    %c0_i32 = arith.constant 0 : i32
    %c0_i32_0 = arith.constant 0 : i32
    %c0_i32_1 = arith.constant 0 : i32
    return %c0_i32, %c0_i32_0 : i32, i32
  }
  func.func @transform_2(%arg0: i32) -> (i32, i32) {
    %c0_i32 = arith.constant 0 : i32
    %c0_i32_0 = arith.constant 0 : i32
    %c0_i32_1 = arith.constant 0 : i32
    return %c0_i32, %c0_i32_0 : i32, i32
  }
  func.func @transform_3(%arg0: i32) -> (i32, i32) {
    %c0_i32 = arith.constant 0 : i32
    %c0_i32_0 = arith.constant 0 : i32
    %c0_i32_1 = arith.constant 0 : i32
    return %c0_i32, %c0_i32_0 : i32, i32
  }
  func.func @transform_4(%arg0: i32) -> (i32, i32) {
    %c0_i32 = arith.constant 0 : i32
    %c0_i32_0 = arith.constant 0 : i32
    return %arg0, %c0_i32 : i32, i32
  }
}

module attributes {stable_mosaic.version = 11 : i64} {
  func.func @critic_kernel(%arg0: i32, %arg1: memref<8x32xf32, #tpu.memory_space<vmem>>, %arg2: memref<32x128xf32, #tpu.memory_space<vmem>>, %arg3: memref<128x128xf32, #tpu.memory_space<vmem>>, %arg4: memref<4x128xf32, #tpu.memory_space<vmem>>, %arg5: memref<8x1xf32, #tpu.memory_space<vmem>>) attributes {dimension_semantics = [#tpu.dimension_semantics<parallel>], iteration_bounds = array<i64: 1>, scalar_prefetch = 0 : i64, scratch_operands = 0 : i64, tpu.core_type = #tpu.core_type<tc>, window_params = [{transform_indices = @transform_0, window_bounds = array<i64: 8, 32>}, {pipeline_mode = #tpu.pipeline_mode<synchronous>, transform_indices = @transform_1, window_bounds = array<i64: 32, 128>}, {pipeline_mode = #tpu.pipeline_mode<synchronous>, transform_indices = @transform_2, window_bounds = array<i64: 128, 128>}, {pipeline_mode = #tpu.pipeline_mode<synchronous>, transform_indices = @transform_3, window_bounds = array<i64: 4, 128>}, {transform_indices = @transform_4, window_bounds = array<i64: 8, 1>}]} {
    %c0 = arith.constant 0 : index
    %c0_0 = arith.constant 0 : index
    %0 = vector.load %arg4[%c0, %c0_0] : memref<4x128xf32, #tpu.memory_space<vmem>>, vector<1x128xf32>
    %c1 = arith.constant 1 : index
    %c0_1 = arith.constant 0 : index
    %1 = vector.load %arg4[%c1, %c0_1] : memref<4x128xf32, #tpu.memory_space<vmem>>, vector<1x128xf32>
    %c2 = arith.constant 2 : index
    %c0_2 = arith.constant 0 : index
    %2 = vector.load %arg4[%c2, %c0_2] : memref<4x128xf32, #tpu.memory_space<vmem>>, vector<1x128xf32>
    %c3 = arith.constant 3 : index
    %c0_3 = arith.constant 0 : index
    %3 = vector.load %arg4[%c3, %c0_3] : memref<4x128xf32, #tpu.memory_space<vmem>>, vector<1x1xf32>
    %c0_4 = arith.constant 0 : index
    %c0_5 = arith.constant 0 : index
    %4 = vector.load %arg1[%c0_4, %c0_5] : memref<8x32xf32, #tpu.memory_space<vmem>>, vector<8x32xf32>
    %c0_6 = arith.constant 0 : index
    %c0_7 = arith.constant 0 : index
    %5 = vector.load %arg2[%c0_6, %c0_7] : memref<32x128xf32, #tpu.memory_space<vmem>>, vector<32x128xf32>
    %cst = arith.constant dense<0.000000e+00> : vector<8x128xf32>
    %6 = tpu.matmul %4, %5, %cst {dimension_numbers = #tpu.dot_dimension_numbers<[1], [0], [0], [1], [0, 0, 1, 1], [], []>} : vector<8x32xf32>, vector<32x128xf32>, vector<8x128xf32> -> vector<8x128xf32>
    %7 = vector.broadcast %0 : vector<1x128xf32> to vector<8x128xf32>
    %8 = arith.addf %6, %7 : vector<8x128xf32>
    %cst_8 = arith.constant 0.000000e+00 : f32
    %9 = vector.broadcast %cst_8 : f32 to vector<8x128xf32>
    %10 = arith.maximumf %8, %9 : vector<8x128xf32>
    %c0_9 = arith.constant 0 : index
    %c0_10 = arith.constant 0 : index
    %11 = vector.load %arg3[%c0_9, %c0_10] : memref<128x128xf32, #tpu.memory_space<vmem>>, vector<128x128xf32>
    %cst_11 = arith.constant dense<0.000000e+00> : vector<8x128xf32>
    %12 = tpu.matmul %10, %11, %cst_11 {dimension_numbers = #tpu.dot_dimension_numbers<[1], [0], [0], [1], [0, 0, 1, 1], [], []>} : vector<8x128xf32>, vector<128x128xf32>, vector<8x128xf32> -> vector<8x128xf32>
    %13 = vector.broadcast %1 : vector<1x128xf32> to vector<8x128xf32>
    %14 = arith.addf %12, %13 : vector<8x128xf32>
    %cst_12 = arith.constant 0.000000e+00 : f32
    %15 = vector.broadcast %cst_12 : f32 to vector<8x128xf32>
    %16 = arith.maximumf %14, %15 : vector<8x128xf32>
    %17 = vector.broadcast %2 : vector<1x128xf32> to vector<8x128xf32>
    %18 = arith.mulf %16, %17 : vector<8x128xf32>
    %cst_13 = arith.constant dense<0.000000e+00> : vector<8xf32>
    %19 = vector.multi_reduction <add>, %18, %cst_13 [1] : vector<8x128xf32> to vector<8xf32>
    %20 = vector.shape_cast %19 : vector<8xf32> to vector<8x1xf32>
    %21 = vector.broadcast %3 : vector<1x1xf32> to vector<8x1xf32>
    %22 = arith.addf %20, %21 : vector<8x1xf32>
    %c0_14 = arith.constant 0 : index
    %c0_15 = arith.constant 0 : index
    %23 = vector.load %arg5[%c0_14, %c0_15] : memref<8x1xf32, #tpu.memory_space<vmem>>, vector<8x1xf32>
    tpu.vector_store %arg5[%c0_14, %c0_15], %22 {strides = array<i32>} : memref<8x1xf32, #tpu.memory_space<vmem>>, vector<8x1xf32>,
    return
  }
  func.func @transform_0(%arg0: i32) -> (i32, i32) {
    %c0_i32 = arith.constant 0 : i32
    %c0_i32_0 = arith.constant 0 : i32
    return %arg0, %c0_i32 : i32, i32
  }
  func.func @transform_1(%arg0: i32) -> (i32, i32) {
    %c0_i32 = arith.constant 0 : i32
    %c0_i32_0 = arith.constant 0 : i32
    %c0_i32_1 = arith.constant 0 : i32
    return %c0_i32, %c0_i32_0 : i32, i32
  }
  func.func @transform_2(%arg0: i32) -> (i32, i32) {
    %c0_i32 = arith.constant 0 : i32
    %c0_i32_0 = arith.constant 0 : i32
    %c0_i32_1 = arith.constant 0 : i32
    return %c0_i32, %c0_i32_0 : i32, i32
  }
  func.func @transform_3(%arg0: i32) -> (i32, i32) {
    %c0_i32 = arith.constant 0 : i32
    %c0_i32_0 = arith.constant 0 : i32
    %c0_i32_1 = arith.constant 0 : i32
    return %c0_i32, %c0_i32_0 : i32, i32
  }
  func.func @transform_4(%arg0: i32) -> (i32, i32) {
    %c0_i32 = arith.constant 0 : i32
    %c0_i32_0 = arith.constant 0 : i32
    return %arg0, %c0_i32 : i32, i32
  }
}

</mosaic_0001>

<llo_original>
// kernel: critic_forward.1
$region0: #{critic_forward.1}
  #allocation0 [shape = 'u32[]', space=smem, size = 0x4, offset = 0x4, fixed_abs, tag = 'smem constant byte address 0x4 - core index']
  #allocation1 [shape = 'u32[144,128]{1,0:T(1,128)}', space=vmem, size = 0x12000, scoped, tag = 'internal scratch']
  %s0 = inlined_call_operand.vmem [shape: f32[8,32], index: 0, kind: input, shape index: {}]
  %s1 = inlined_call_operand.hbm [shape: f32[32,128], index: 1, kind: input, shape index: {}]
  %s2 = inlined_call_operand.hbm [shape: f32[128,128], index: 2, kind: input, shape index: {}]
  %s3 = inlined_call_operand.vmem [shape: f32[4,128], index: 3, kind: input, shape index: {}]
  %s4 = inlined_call_operand.vmem [shape: f32[8,1], index: 4, kind: output, shape index: {}]
  %s5 = sld [smem:[#allocation0]]
  $region34: #{critic_forward.1} parent=0
    _
  %s7 = ssub.s32 1, %s5
  %s8 = scalar_select 0, %s7, %s5
  $region1: #{critic_forward.1} parent=0
    #allocation2 [shape = 'u8[16384]{0}', space=vmem, size = 0x4000, scoped, tag = 'input window, operand 1, single buffered']
    #allocation3 [shape = 's32[1]{0}', space=sflag, size = 0x4, scoped, tag = 'scoped memory for critic_forward.1']
    #allocation4 [shape = 'u8[65536]{0}', space=vmem, size = 0x10000, scoped, tag = 'input window, operand 2, single buffered']
    #allocation5 [shape = 's32[1]{0}', space=sflag, size = 0x4, scoped, tag = 'scoped memory for critic_forward.1']
    %9 = vsyncpa [#allocation3], 0
    %10 = vsyncpa [#allocation5], 0
    // Predicated region
    $region2: #{critic_forward.1} parent=1 // pred_check
      _
    $region3: #{critic_forward.1} parent=1 // pred_check_branch
      %12 = sbr.rel (0) target = $region5
    $region4: #{critic_forward.1} parent=1 // pred_region
      _
    $region5: #{critic_forward.1} parent=1 // pred_fallthru
      _
    // Predicated region
    $region6: #{critic_forward.1} parent=1 // pred_check
      _
    $region7: #{critic_forward.1} parent=1 // pred_check_branch
      %14 = sbr.rel (0) target = $region9
    $region8: #{critic_forward.1} parent=1 // pred_region
      %s16 = ssub.s32 512, 512
      %17 = vsyncadd [#allocation3], %s16
      %s18 = sshll.u32 [#allocation2], 4
      %s19 = int_to_ptr.vmem [resolvable:$true] %s18
      %24 = dma.hbm_to_vmem [thread:$0]  %s1, 512, %s19, [#allocation3], 128, 128, 8
    $region9: #{critic_forward.1} parent=1 // pred_fallthru
      _
    // Predicated region
    $region10: #{critic_forward.1} parent=1 // pred_check
      _
    $region11: #{critic_forward.1} parent=1 // pred_check_branch
      %26 = sbr.rel (0) target = $region13
    $region12: #{critic_forward.1} parent=1 // pred_region
      %s28 = ssub.s32 2048, 2048
      %29 = vsyncadd [#allocation5], %s28
      %s30 = sshll.u32 [#allocation4], 4
      %s31 = int_to_ptr.vmem [resolvable:$true] %s30
      %36 = dma.hbm_to_vmem [thread:$0]  %s2, 2048, %s31, [#allocation5], 128, 128, 8
    $region13: #{critic_forward.1} parent=1 // pred_fallthru
      _
    // Predicated region
    $region14: #{critic_forward.1} parent=1 // pred_check
      _
    $region15: #{critic_forward.1} parent=1 // pred_check_branch
      %38 = sbr.rel (0) target = $region17
    $region16: #{critic_forward.1} parent=1 // pred_region
      _
    $region17: #{critic_forward.1} parent=1 // pred_fallthru
      _
    // Predicated region
    $region18: #{critic_forward.1} parent=1 // pred_check
      _
    $region19: #{critic_forward.1} parent=1 // pred_check_branch
      %40 = sbr.rel (0) target = $region21
    $region20: #{critic_forward.1} parent=1 // pred_region
      %41 = dma.done [#allocation3], 512
    $region21: #{critic_forward.1} parent=1 // pred_fallthru
      _
    // Predicated region
    $region22: #{critic_forward.1} parent=1 // pred_check
      _
    $region23: #{critic_forward.1} parent=1 // pred_check_branch
      %43 = sbr.rel (0) target = $region25
    $region24: #{critic_forward.1} parent=1 // pred_region
      %44 = dma.done [#allocation5], 2048
    $region25: #{critic_forward.1} parent=1 // pred_fallthru
      _
    %v45 = vld [vmem:[%s3] sm:$0x1]
    %v46 = vld [vmem:[%s3 + $0x1] sm:$0x1]
    %v47 = vld [vmem:[%s3 + $0x2] sm:$0x1]
    %v48 = vld [vmem:[%s3 + $0x3] sm:$0x1]
    %v49 = vld [vmem:[%s0] sm:$0xff]
    %v50 = vld [vmem:[#allocation2] sm:$0xff]
    %v51 = vld [vmem:[#allocation2 + $0x8] sm:$0xff]
    %v52 = vld [vmem:[#allocation2 + $0x10] sm:$0xff]
    %v53 = vld [vmem:[#allocation2 + $0x18] sm:$0xff]
    %v54 = vlaneseq
    %v55 = vshrl.u32 %v54, 7
    %v56 = vsub.s32 0, %v55
    %v57 = vrot.slane %v45, %v56
    %vm58 = vcmask 261120
    %v60 = vsel %vm58, %v49, 0
    %62 = vmatprep.subr.mxu0 0.0
    %63 = vmatpush1.msra.mxu0 0.0
    %64 = vmatprep.subr.mxu0 0.0
    %65 = vmatpush1.msra.mxu0 0.0
    %66 = vmatprep.subr.mxu0 0.0
    %67 = vmatpush1.msra.mxu0 0.0
    %68 = vmatprep.subr.mxu0 0.0
    %69 = vmatpush1.msra.mxu0 0.0
    %70 = vmatprep.subr.mxu0 0.0
    %71 = vmatpush1.msra.mxu0 0.0
    %72 = vmatprep.subr.mxu0 0.0
    %73 = vmatpush1.msra.mxu0 0.0
    %74 = vmatprep.subr.mxu0 0.0
    %75 = vmatpush1.msra.mxu0 0.0
    %76 = vmatprep.subr.mxu0 0.0
    %77 = vmatpush1.msra.mxu0 0.0
    %78 = vmatprep.subr.mxu0 0.0
    %79 = vmatpush1.msra.mxu0 0.0
    %80 = vmatprep.subr.mxu0 0.0
    %81 = vmatpush1.msra.mxu0 0.0
    %82 = vmatprep.subr.mxu0 0.0
    %83 = vmatpush1.msra.mxu0 0.0
    %84 = vmatprep.subr.mxu0 0.0
    %85 = vmatpush1.msra.mxu0 0.0
    %86 = vmatprep.subr.mxu0 0.0
    %87 = vmatpush1.msra.mxu0 %v53
    %88 = vmatprep.subr.mxu0 0.0
    %89 = vmatpush1.msra.mxu0 %v52
    %90 = vmatprep.subr.mxu0 0.0
    %91 = vmatpush1.msra.mxu0 %v51
    %92 = vmatprep.subr.mxu0 0.0
    %93 = vmatpush1.msra.mxu0 %v50
    %94 = vmatprep.subr.mxu0 0.0
    %95 = vmatpush2.msra.mxu0 0.0
    %96 = vmatprep.subr.mxu0 0.0
    %97 = vmatpush2.msra.mxu0 0.0
    %98 = vmatprep.subr.mxu0 0.0
    %99 = vmatpush2.msra.mxu0 0.0
    %100 = vmatprep.subr.mxu0 0.0
    %101 = vmatpush2.msra.mxu0 0.0
    %102 = vmatprep.subr.mxu0 0.0
    %103 = vmatpush2.msra.mxu0 0.0
    %104 = vmatprep.subr.mxu0 0.0
    %105 = vmatpush2.msra.mxu0 0.0
    %106 = vmatprep.subr.mxu0 0.0
    %107 = vmatpush2.msra.mxu0 0.0
    %108 = vmatprep.subr.mxu0 0.0
    %109 = vmatpush2.msra.mxu0 0.0
    %110 = vmatprep.subr.mxu0 0.0
    %111 = vmatpush2.msra.mxu0 0.0
    %112 = vmatprep.subr.mxu0 0.0
    %113 = vmatpush2.msra.mxu0 0.0
    %114 = vmatprep.subr.mxu0 0.0
    %115 = vmatpush2.msra.mxu0 0.0
    %116 = vmatprep.subr.mxu0 0.0
    %117 = vmatpush2.msra.mxu0 0.0
    %118 = vmatprep.subr.mxu0 0.0
    %119 = vmatpush2.msra.mxu0 0.0
    %120 = vmatprep.subr.mxu0 0.0
    %121 = vmatpush2.msra.mxu0 0.0
    %122 = vmatprep.subr.mxu0 0.0
    %123 = vmatpush2.msra.mxu0 0.0
    %124 = vmatprep.subr.mxu0 0.0
    %125 = vmatpush2.msra.mxu0 0.0
    %126 = vmatprep.mubr.f32.mxu0 0.0
    %127 = vmatmul.mubr.f32.gmra.mxu0 %v60
    %v128 = vpop.f32.mrf.mxu0
    %v129 = vadd.f32 %v57, %v128
    %v130 = vpop.f32.mrf.mxu0
    %131 = vdwg.mxu0
    %v132 = vmax.f32 %v129, 0.0
    %v133 = vld [vmem:[#allocation4] sm:$0xff]
    %v134 = vld [vmem:[#allocation4 + $0x8] sm:$0xff]
    %v135 = vld [vmem:[#allocation4 + $0x10] sm:$0xff]
    %v136 = vld [vmem:[#allocation4 + $0x18] sm:$0xff]
    %v137 = vld [vmem:[#allocation4 + $0x20] sm:$0xff]
    %v138 = vld [vmem:[#allocation4 + $0x28] sm:$0xff]
    %v139 = vld [vmem:[#allocation4 + $0x30] sm:$0xff]
    %v140 = vld [vmem:[#allocation4 + $0x38] sm:$0xff]
    %v141 = vld [vmem:[#allocation4 + $0x40] sm:$0xff]
    %v142 = vld [vmem:[#allocation4 + $0x48] sm:$0xff]
    %v143 = vld [vmem:[#allocation4 + $0x50] sm:$0xff]
    %v144 = vld [vmem:[#allocation4 + $0x58] sm:$0xff]
    %v145 = vld [vmem:[#allocation4 + $0x60] sm:$0xff]
    %v146 = vld [vmem:[#allocation4 + $0x68] sm:$0xff]
    %v147 = vld [vmem:[#allocation4 + $0x70] sm:$0xff]
    %v148 = vld [vmem:[#allocation4 + $0x78] sm:$0xff]
    %v149 = vlaneseq
    %v150 = vshrl.u32 %v149, 7
    %v151 = vsub.s32 0, %v150
    %v152 = vrot.slane %v46, %v151
    %153 = vmatprep.subr.mxu0 0.0
    %154 = vmatpush1.msra.mxu0 %v148
    %155 = vmatprep.subr.mxu0 0.0
    %156 = vmatpush1.msra.mxu0 %v147
    %157 = vmatprep.subr.mxu0 0.0
    %158 = vmatpush1.msra.mxu0 %v146
    %159 = vmatprep.subr.mxu0 0.0
    %160 = vmatpush1.msra.mxu0 %v145
    %161 = vmatprep.subr.mxu0 0.0
    %162 = vmatpush1.msra.mxu0 %v144
    %163 = vmatprep.subr.mxu0 0.0
    %164 = vmatpush1.msra.mxu0 %v143
    %165 = vmatprep.subr.mxu0 0.0
    %166 = vmatpush1.msra.mxu0 %v142
    %167 = vmatprep.subr.mxu0 0.0
    %168 = vmatpush1.msra.mxu0 %v141
    %169 = vmatprep.subr.mxu0 0.0
    %170 = vmatpush1.msra.mxu0 %v140
    %171 = vmatprep.subr.mxu0 0.0
    %172 = vmatpush1.msra.mxu0 %v139
    %173 = vmatprep.subr.mxu0 0.0
    %174 = vmatpush1.msra.mxu0 %v138
    %175 = vmatprep.subr.mxu0 0.0
    %176 = vmatpush1.msra.mxu0 %v137
    %177 = vmatprep.subr.mxu0 0.0
    %178 = vmatpush1.msra.mxu0 %v136
    %179 = vmatprep.subr.mxu0 0.0
    %180 = vmatpush1.msra.mxu0 %v135
    %181 = vmatprep.subr.mxu0 0.0
    %182 = vmatpush1.msra.mxu0 %v134
    %183 = vmatprep.subr.mxu0 0.0
    %184 = vmatpush1.msra.mxu0 %v133
    %185 = vmatprep.subr.mxu0 0.0
    %186 = vmatpush2.msra.mxu0 0.0
    %187 = vmatprep.subr.mxu0 0.0
    %188 = vmatpush2.msra.mxu0 0.0
    %189 = vmatprep.subr.mxu0 0.0
    %190 = vmatpush2.msra.mxu0 0.0
    %191 = vmatprep.subr.mxu0 0.0
    %192 = vmatpush2.msra.mxu0 0.0
    %193 = vmatprep.subr.mxu0 0.0
    %194 = vmatpush2.msra.mxu0 0.0
    %195 = vmatprep.subr.mxu0 0.0
    %196 = vmatpush2.msra.mxu0 0.0
    %197 = vmatprep.subr.mxu0 0.0
    %198 = vmatpush2.msra.mxu0 0.0
    %199 = vmatprep.subr.mxu0 0.0
    %200 = vmatpush2.msra.mxu0 0.0
    %201 = vmatprep.subr.mxu0 0.0
    %202 = vmatpush2.msra.mxu0 0.0
    %203 = vmatprep.subr.mxu0 0.0
    %204 = vmatpush2.msra.mxu0 0.0
    %205 = vmatprep.subr.mxu0 0.0
    %206 = vmatpush2.msra.mxu0 0.0
    %207 = vmatprep.subr.mxu0 0.0
    %208 = vmatpush2.msra.mxu0 0.0
    %209 = vmatprep.subr.mxu0 0.0
    %210 = vmatpush2.msra.mxu0 0.0
    %211 = vmatprep.subr.mxu0 0.0
    %212 = vmatpush2.msra.mxu0 0.0
    %213 = vmatprep.subr.mxu0 0.0
    %214 = vmatpush2.msra.mxu0 0.0
    %215 = vmatprep.subr.mxu0 0.0
    %216 = vmatpush2.msra.mxu0 0.0
    %217 = vmatprep.mubr.f32.mxu0 0.0
    %218 = vmatmul.mubr.f32.gmra.mxu0 %v132
    %v219 = vpop.f32.mrf.mxu0
    %v220 = vadd.f32 %v152, %v219
    %v221 = vpop.f32.mrf.mxu0
    %222 = vdwg.mxu0
    %v223 = vmax.f32 %v220, 0.0
    %v224 = vlaneseq
    %v225 = vshrl.u32 %v224, 7
    %v226 = vsub.s32 0, %v225
    %v227 = vrot.slane %v47, %v226
    %v228 = vmul.f32 %v223, %v227
    %229 = vadd.xlane.f32.xlu0 %v228
    %v230 = vpop.xlane.xlu0 %229
    %v231 = vlaneseq
    %v232 = vshrl.u32 %v231, 7
    %v233 = vsub.s32 0, %v232
    %v234 = vrot.slane %v48, %v233
    %v235 = vadd.f32 %v230, %v234
    %vm236 = vcmask 7168
    %237 = vst.msk [vmem:[%s4] sm:$0xff] %vm236, %v235
    // Predicated region
    $region26: #{critic_forward.1} parent=1 // pred_check
      _
    $region27: #{critic_forward.1} parent=1 // pred_check_branch
      %239 = sbr.rel (0) target = $region29
    $region28: #{critic_forward.1} parent=1 // pred_region
      _
    $region29: #{critic_forward.1} parent=1 // pred_fallthru
      _
    // Predicated region
    $region30: #{critic_forward.1} parent=1 // pred_check
      _
    $region31: #{critic_forward.1} parent=1 // pred_check_branch
      %241 = sbr.rel (0) target = $region33
    $region32: #{critic_forward.1} parent=1 // pred_region
      _
    $region33: #{critic_forward.1} parent=1 // pred_fallthru
      _
    %242 = vsyncpa [#allocation3], 1
    %243 = vsyncpa [#allocation5], 1

// kernel: critic_forward.1
$region0: #{critic_forward.1}
  #allocation0 [shape = 'u32[]', space=smem, size = 0x4, offset = 0x4, fixed_abs, tag = 'smem constant byte address 0x4 - core index']
  #allocation1 [shape = 'u32[144,128]{1,0:T(1,128)}', space=vmem, size = 0x12000, scoped, tag = 'internal scratch']
  %s0 = inlined_call_operand.vmem [shape: f32[8,32], index: 0, kind: input, shape index: {}]
  %s1 = inlined_call_operand.hbm [shape: f32[32,128], index: 1, kind: input, shape index: {}]
  %s2 = inlined_call_operand.hbm [shape: f32[128,128], index: 2, kind: input, shape index: {}]
  %s3 = inlined_call_operand.vmem [shape: f32[4,128], index: 3, kind: input, shape index: {}]
  %s4 = inlined_call_operand.vmem [shape: f32[8,1], index: 4, kind: output, shape index: {}]
  %s5 = sld [smem:[#allocation0]]
  $region34: #{critic_forward.1} parent=0
    _
  %s7 = ssub.s32 1, %s5
  %s8 = scalar_select 0, %s7, %s5
  $region1: #{critic_forward.1} parent=0
    #allocation2 [shape = 'u8[16384]{0}', space=vmem, size = 0x4000, scoped, tag = 'input window, operand 1, single buffered']
    #allocation3 [shape = 's32[1]{0}', space=sflag, size = 0x4, scoped, tag = 'scoped memory for critic_forward.1']
    #allocation4 [shape = 'u8[65536]{0}', space=vmem, size = 0x10000, scoped, tag = 'input window, operand 2, single buffered']
    #allocation5 [shape = 's32[1]{0}', space=sflag, size = 0x4, scoped, tag = 'scoped memory for critic_forward.1']
    %9 = vsyncpa [#allocation3], 0
    %10 = vsyncpa [#allocation5], 0
    // Predicated region
    $region2: #{critic_forward.1} parent=1 // pred_check
      _
    $region3: #{critic_forward.1} parent=1 // pred_check_branch
      %12 = sbr.rel (0) target = $region5
    $region4: #{critic_forward.1} parent=1 // pred_region
      _
    $region5: #{critic_forward.1} parent=1 // pred_fallthru
      _
    // Predicated region
    $region6: #{critic_forward.1} parent=1 // pred_check
      _
    $region7: #{critic_forward.1} parent=1 // pred_check_branch
      %14 = sbr.rel (0) target = $region9
    $region8: #{critic_forward.1} parent=1 // pred_region
      %s16 = ssub.s32 512, 512
      %17 = vsyncadd [#allocation3], %s16
      %s18 = sshll.u32 [#allocation2], 4
      %s19 = int_to_ptr.vmem [resolvable:$true] %s18
      %24 = dma.hbm_to_vmem [thread:$0]  %s1, 512, %s19, [#allocation3], 128, 128, 8
    $region9: #{critic_forward.1} parent=1 // pred_fallthru
      _
    // Predicated region
    $region10: #{critic_forward.1} parent=1 // pred_check
      _
    $region11: #{critic_forward.1} parent=1 // pred_check_branch
      %26 = sbr.rel (0) target = $region13
    $region12: #{critic_forward.1} parent=1 // pred_region
      %s28 = ssub.s32 2048, 2048
      %29 = vsyncadd [#allocation5], %s28
      %s30 = sshll.u32 [#allocation4], 4
      %s31 = int_to_ptr.vmem [resolvable:$true] %s30
      %36 = dma.hbm_to_vmem [thread:$0]  %s2, 2048, %s31, [#allocation5], 128, 128, 8
    $region13: #{critic_forward.1} parent=1 // pred_fallthru
      _
    // Predicated region
    $region14: #{critic_forward.1} parent=1 // pred_check
      _
    $region15: #{critic_forward.1} parent=1 // pred_check_branch
      %38 = sbr.rel (0) target = $region17
    $region16: #{critic_forward.1} parent=1 // pred_region
      _
    $region17: #{critic_forward.1} parent=1 // pred_fallthru
      _
    // Predicated region
    $region18: #{critic_forward.1} parent=1 // pred_check
      _
    $region19: #{critic_forward.1} parent=1 // pred_check_branch
      %40 = sbr.rel (0) target = $region21
    $region20: #{critic_forward.1} parent=1 // pred_region
      %41 = dma.done [#allocation3], 512
    $region21: #{critic_forward.1} parent=1 // pred_fallthru
      _
    // Predicated region
    $region22: #{critic_forward.1} parent=1 // pred_check
      _
    $region23: #{critic_forward.1} parent=1 // pred_check_branch
      %43 = sbr.rel (0) target = $region25
    $region24: #{critic_forward.1} parent=1 // pred_region
      %44 = dma.done [#allocation5], 2048
    $region25: #{critic_forward.1} parent=1 // pred_fallthru
      _
    %v45 = vld [vmem:[%s3] sm:$0x1]
    %v46 = vld [vmem:[%s3 + $0x1] sm:$0x1]
    %v47 = vld [vmem:[%s3 + $0x2] sm:$0x1]
    %v48 = vld [vmem:[%s3 + $0x3] sm:$0x1]
    %v49 = vld [vmem:[%s0] sm:$0xff]
    %v50 = vld [vmem:[#allocation2] sm:$0xff]
    %v51 = vld [vmem:[#allocation2 + $0x8] sm:$0xff]
    %v52 = vld [vmem:[#allocation2 + $0x10] sm:$0xff]
    %v53 = vld [vmem:[#allocation2 + $0x18] sm:$0xff]
    %v54 = vlaneseq
    %v55 = vshrl.u32 %v54, 7
    %v56 = vsub.s32 0, %v55
    %v57 = vrot.slane %v45, %v56
    %vm58 = vcmask 261120
    %v60 = vsel %vm58, %v49, 0
    %62 = vmatprep.subr.mxu0 0.0
    %63 = vmatpush1.msra.mxu0 0.0
    %64 = vmatprep.subr.mxu0 0.0
    %65 = vmatpush1.msra.mxu0 0.0
    %66 = vmatprep.subr.mxu0 0.0
    %67 = vmatpush1.msra.mxu0 0.0
    %68 = vmatprep.subr.mxu0 0.0
    %69 = vmatpush1.msra.mxu0 0.0
    %70 = vmatprep.subr.mxu0 0.0
    %71 = vmatpush1.msra.mxu0 0.0
    %72 = vmatprep.subr.mxu0 0.0
    %73 = vmatpush1.msra.mxu0 0.0
    %74 = vmatprep.subr.mxu0 0.0
    %75 = vmatpush1.msra.mxu0 0.0
    %76 = vmatprep.subr.mxu0 0.0
    %77 = vmatpush1.msra.mxu0 0.0
    %78 = vmatprep.subr.mxu0 0.0
    %79 = vmatpush1.msra.mxu0 0.0
    %80 = vmatprep.subr.mxu0 0.0
    %81 = vmatpush1.msra.mxu0 0.0
    %82 = vmatprep.subr.mxu0 0.0
    %83 = vmatpush1.msra.mxu0 0.0
    %84 = vmatprep.subr.mxu0 0.0
    %85 = vmatpush1.msra.mxu0 0.0
    %86 = vmatprep.subr.mxu0 0.0
    %87 = vmatpush1.msra.mxu0 %v53
    %88 = vmatprep.subr.mxu0 0.0
    %89 = vmatpush1.msra.mxu0 %v52
    %90 = vmatprep.subr.mxu0 0.0
    %91 = vmatpush1.msra.mxu0 %v51
    %92 = vmatprep.subr.mxu0 0.0
    %93 = vmatpush1.msra.mxu0 %v50
    %94 = vmatprep.subr.mxu0 0.0
    %95 = vmatpush2.msra.mxu0 0.0
    %96 = vmatprep.subr.mxu0 0.0
    %97 = vmatpush2.msra.mxu0 0.0
    %98 = vmatprep.subr.mxu0 0.0
    %99 = vmatpush2.msra.mxu0 0.0
    %100 = vmatprep.subr.mxu0 0.0
    %101 = vmatpush2.msra.mxu0 0.0
    %102 = vmatprep.subr.mxu0 0.0
    %103 = vmatpush2.msra.mxu0 0.0
    %104 = vmatprep.subr.mxu0 0.0
    %105 = vmatpush2.msra.mxu0 0.0
    %106 = vmatprep.subr.mxu0 0.0
    %107 = vmatpush2.msra.mxu0 0.0
    %108 = vmatprep.subr.mxu0 0.0
    %109 = vmatpush2.msra.mxu0 0.0
    %110 = vmatprep.subr.mxu0 0.0
    %111 = vmatpush2.msra.mxu0 0.0
    %112 = vmatprep.subr.mxu0 0.0
    %113 = vmatpush2.msra.mxu0 0.0
    %114 = vmatprep.subr.mxu0 0.0
    %115 = vmatpush2.msra.mxu0 0.0
    %116 = vmatprep.subr.mxu0 0.0
    %117 = vmatpush2.msra.mxu0 0.0
    %118 = vmatprep.subr.mxu0 0.0
    %119 = vmatpush2.msra.mxu0 0.0
    %120 = vmatprep.subr.mxu0 0.0
    %121 = vmatpush2.msra.mxu0 0.0
    %122 = vmatprep.subr.mxu0 0.0
    %123 = vmatpush2.msra.mxu0 0.0
    %124 = vmatprep.subr.mxu0 0.0
    %125 = vmatpush2.msra.mxu0 0.0
    %126 = vmatprep.mubr.f32.mxu0 0.0
    %127 = vmatmul.mubr.f32.gmra.mxu0 %v60
    %v128 = vpop.f32.mrf.mxu0
    %v129 = vadd.f32 %v57, %v128
    %v130 = vpop.f32.mrf.mxu0
    %131 = vdwg.mxu0
    %v132 = vmax.f32 %v129, 0.0
    %v133 = vld [vmem:[#allocation4] sm:$0xff]
    %v134 = vld [vmem:[#allocation4 + $0x8] sm:$0xff]
    %v135 = vld [vmem:[#allocation4 + $0x10] sm:$0xff]
    %v136 = vld [vmem:[#allocation4 + $0x18] sm:$0xff]
    %v137 = vld [vmem:[#allocation4 + $0x20] sm:$0xff]
    %v138 = vld [vmem:[#allocation4 + $0x28] sm:$0xff]
    %v139 = vld [vmem:[#allocation4 + $0x30] sm:$0xff]
    %v140 = vld [vmem:[#allocation4 + $0x38] sm:$0xff]
    %v141 = vld [vmem:[#allocation4 + $0x40] sm:$0xff]
    %v142 = vld [vmem:[#allocation4 + $0x48] sm:$0xff]
    %v143 = vld [vmem:[#allocation4 + $0x50] sm:$0xff]
    %v144 = vld [vmem:[#allocation4 + $0x58] sm:$0xff]
    %v145 = vld [vmem:[#allocation4 + $0x60] sm:$0xff]
    %v146 = vld [vmem:[#allocation4 + $0x68] sm:$0xff]
    %v147 = vld [vmem:[#allocation4 + $0x70] sm:$0xff]
    %v148 = vld [vmem:[#allocation4 + $0x78] sm:$0xff]
    %v149 = vlaneseq
    %v150 = vshrl.u32 %v149, 7
    %v151 = vsub.s32 0, %v150
    %v152 = vrot.slane %v46, %v151
    %153 = vmatprep.subr.mxu0 0.0
    %154 = vmatpush1.msra.mxu0 %v148
    %155 = vmatprep.subr.mxu0 0.0
    %156 = vmatpush1.msra.mxu0 %v147
    %157 = vmatprep.subr.mxu0 0.0
    %158 = vmatpush1.msra.mxu0 %v146
    %159 = vmatprep.subr.mxu0 0.0
    %160 = vmatpush1.msra.mxu0 %v145
    %161 = vmatprep.subr.mxu0 0.0
    %162 = vmatpush1.msra.mxu0 %v144
    %163 = vmatprep.subr.mxu0 0.0
    %164 = vmatpush1.msra.mxu0 %v143
    %165 = vmatprep.subr.mxu0 0.0
    %166 = vmatpush1.msra.mxu0 %v142
    %167 = vmatprep.subr.mxu0 0.0
    %168 = vmatpush1.msra.mxu0 %v141
    %169 = vmatprep.subr.mxu0 0.0
    %170 = vmatpush1.msra.mxu0 %v140
    %171 = vmatprep.subr.mxu0 0.0
    %172 = vmatpush1.msra.mxu0 %v139
    %173 = vmatprep.subr.mxu0 0.0
    %174 = vmatpush1.msra.mxu0 %v138
    %175 = vmatprep.subr.mxu0 0.0
    %176 = vmatpush1.msra.mxu0 %v137
    %177 = vmatprep.subr.mxu0 0.0
    %178 = vmatpush1.msra.mxu0 %v136
    %179 = vmatprep.subr.mxu0 0.0
    %180 = vmatpush1.msra.mxu0 %v135
    %181 = vmatprep.subr.mxu0 0.0
    %182 = vmatpush1.msra.mxu0 %v134
    %183 = vmatprep.subr.mxu0 0.0
    %184 = vmatpush1.msra.mxu0 %v133
    %185 = vmatprep.subr.mxu0 0.0
    %186 = vmatpush2.msra.mxu0 0.0
    %187 = vmatprep.subr.mxu0 0.0
    %188 = vmatpush2.msra.mxu0 0.0
    %189 = vmatprep.subr.mxu0 0.0
    %190 = vmatpush2.msra.mxu0 0.0
    %191 = vmatprep.subr.mxu0 0.0
    %192 = vmatpush2.msra.mxu0 0.0
    %193 = vmatprep.subr.mxu0 0.0
    %194 = vmatpush2.msra.mxu0 0.0
    %195 = vmatprep.subr.mxu0 0.0
    %196 = vmatpush2.msra.mxu0 0.0
    %197 = vmatprep.subr.mxu0 0.0
    %198 = vmatpush2.msra.mxu0 0.0
    %199 = vmatprep.subr.mxu0 0.0
    %200 = vmatpush2.msra.mxu0 0.0
    %201 = vmatprep.subr.mxu0 0.0
    %202 = vmatpush2.msra.mxu0 0.0
    %203 = vmatprep.subr.mxu0 0.0
    %204 = vmatpush2.msra.mxu0 0.0
    %205 = vmatprep.subr.mxu0 0.0
    %206 = vmatpush2.msra.mxu0 0.0
    %207 = vmatprep.subr.mxu0 0.0
    %208 = vmatpush2.msra.mxu0 0.0
    %209 = vmatprep.subr.mxu0 0.0
    %210 = vmatpush2.msra.mxu0 0.0
    %211 = vmatprep.subr.mxu0 0.0
    %212 = vmatpush2.msra.mxu0 0.0
    %213 = vmatprep.subr.mxu0 0.0
    %214 = vmatpush2.msra.mxu0 0.0
    %215 = vmatprep.subr.mxu0 0.0
    %216 = vmatpush2.msra.mxu0 0.0
    %217 = vmatprep.mubr.f32.mxu0 0.0
    %218 = vmatmul.mubr.f32.gmra.mxu0 %v132
    %v219 = vpop.f32.mrf.mxu0
    %v220 = vadd.f32 %v152, %v219
    %v221 = vpop.f32.mrf.mxu0
    %222 = vdwg.mxu0
    %v223 = vmax.f32 %v220, 0.0
    %v224 = vlaneseq
    %v225 = vshrl.u32 %v224, 7
    %v226 = vsub.s32 0, %v225
    %v227 = vrot.slane %v47, %v226
    %v228 = vmul.f32 %v223, %v227
    %229 = vadd.xlane.f32.xlu0 %v228
    %v230 = vpop.xlane.xlu0 %229
    %v231 = vlaneseq
    %v232 = vshrl.u32 %v231, 7
    %v233 = vsub.s32 0, %v232
    %v234 = vrot.slane %v48, %v233
    %v235 = vadd.f32 %v230, %v234
    %vm236 = vcmask 7168
    %237 = vst.msk [vmem:[%s4] sm:$0xff] %vm236, %v235
    // Predicated region
    $region26: #{critic_forward.1} parent=1 // pred_check
      _
    $region27: #{critic_forward.1} parent=1 // pred_check_branch
      %239 = sbr.rel (0) target = $region29
    $region28: #{critic_forward.1} parent=1 // pred_region
      _
    $region29: #{critic_forward.1} parent=1 // pred_fallthru
      _
    // Predicated region
    $region30: #{critic_forward.1} parent=1 // pred_check
      _
    $region31: #{critic_forward.1} parent=1 // pred_check_branch
      %241 = sbr.rel (0) target = $region33
    $region32: #{critic_forward.1} parent=1 // pred_region
      _
    $region33: #{critic_forward.1} parent=1 // pred_fallthru
      _
    %242 = vsyncpa [#allocation3], 1
    %243 = vsyncpa [#allocation5], 1

</llo_original>
